<compile_context>
chip_gen: v5e
topology: v5e:2x2
jax: 0.10.0
libtpu: 0.0.40
codegen_flags: <defaults>
</compile_context>

<pallas_src>
import math

import jax
import jax.numpy as jnp
from jax.experimental import pallas as pl
from jax.experimental.pallas import tpu as pltpu

BN_EPS = 1e-5                                  # nn.BatchNorm2d default eps
BN_SCALE = 1.0 / math.sqrt(1.0 + BN_EPS)       # eval BN, default running stats / affine


def chex_head_kernel(feat_ref, wt_ref, b_ref, lm_ref, lg_ref):
    """Processes a block of `Bn` batch elements per grid step.

    feat_ref: [Bn, C, HW]  backbone feature map (NCHW with spatial flattened)
    wt_ref:   [K, C]       K per-class 1x1-conv classifier weights, stacked (transposed)
    b_ref:    [K, 1]       classifier biases
    lm_ref:   [Bn, K, HW]  per-pixel logit maps (lane-dense along HW)
    lg_ref:   [Bn, K, 1]   pooled per-class logits
    """
    wt = wt_ref[...]                  # [K, C]
    bcol = b_ref[...]                 # [K, 1]
    bn = feat_ref.shape[0]

    # Static unroll over the (small) per-block batch; each image is one plain 2D MXU matmul.
    for i in range(bn):
        feat_i = feat_ref[i]                                                # [C, HW]
        # 1x1-conv classifier heads for all K classes at once (bias added after, so the
        # bias-free map can be reused for the pooled logit).
        lm_nb = jnp.dot(wt, feat_i, preferred_element_type=jnp.float32)     # [K, HW]
        lm_ref[i] = (lm_nb + bcol).astype(lm_ref.dtype)

        # GlobalPool('AVG') + eval-BN (default stats => scale by 1/sqrt(1+eps)) + classifier,
        # derived from the bias-free logit map:  w . mean(feat) == mean(w . feat).
        pooled_nb = jnp.mean(lm_nb, axis=1, keepdims=True)                  # [K, 1]
        lg_ref[i] = (BN_SCALE * pooled_nb + bcol).astype(lg_ref.dtype)
        # F.dropout(p=fc_drop, training=False) is identity.


def chex_classifier_forward(feat_map_nchw, w, b, *, batch_block=None):
    """feat_map_nchw: [N, C, H, W] (PyTorch layout); w: [C, K]; b: [K].

    Returns (logits [N, K], logit_maps [N, K, H, W]) -- the stacked equivalent of the
    per-class python lists returned by the PyTorch forward (with seg=None, eval mode).
    """
    N, C, H, W = feat_map_nchw.shape
    K = w.shape[1]
    HW = H * W

    # Glue: NCHW -> [N, C, HW] is a pure reshape (no HBM transpose pass).
    # Do NOT force a dtype: if the backbone emits bf16 we keep it (MXU takes bf16 natively;
    # the dot accumulates in f32 via preferred_element_type).
    feat = feat_map_nchw.reshape(N, C, HW)
    wt = jnp.transpose(w)                       # [K, C] (tiny)
    bc = b.reshape(K, 1).astype(jnp.float32)

    if batch_block is None:
        # Batch several images per grid step to amortize ~0.35us per-step overhead, but
        # (a) keep >= 2 grid steps so both v7x TensorCores get work on the parallel axis,
        # (b) keep double-buffered blocks well under the default scoped-VMEM limit
        #     (conservative for v7x's 64 MiB physical / 32 MiB default).
        per_img_bytes = C * HW * feat.dtype.itemsize + K * HW * 4
        vmem_cap = max(1, (16 * 1024 * 1024) // per_img_bytes)
        batch_block = max(1, min(N // 2 if N > 1 else 1, vmem_cap))
    while N % batch_block:
        batch_block -= 1
    bn = batch_block
    grid = (N // bn,)

    lm, lg = pl.pallas_call(
        chex_head_kernel,
        out_shape=(
            jax.ShapeDtypeStruct((N, K, HW), jnp.float32),
            jax.ShapeDtypeStruct((N, K, 1), jnp.float32),
        ),
        grid_spec=pltpu.PrefetchScalarGridSpec(
            num_scalar_prefetch=0,
            grid=grid,
            in_specs=[
                pl.BlockSpec((bn, C, HW), lambda n: (n, 0, 0)),
                pl.BlockSpec((K, C), lambda n: (0, 0)),     # grid-invariant, tiny
                pl.BlockSpec((K, 1), lambda n: (0, 0)),     # grid-invariant, tiny
            ],
            out_specs=(
                pl.BlockSpec((bn, K, HW), lambda n: (n, 0, 0)),
                pl.BlockSpec((bn, K, 1), lambda n: (n, 0, 0)),
            ),
        ),
        compiler_params=pltpu.CompilerParams(
            dimension_semantics=("parallel",)),
    )(feat, wt, bc)

    logits = lg.reshape(N, K)
    logit_maps = lm.reshape(N, K, H, W)          # pure reshape (no transpose pass)
    return logits, logit_maps


def ref_forward(feat_nchw, w, b):
    """Pure-JAX reference mirroring the PyTorch semantics (seg=None, eval mode)."""
    lm = jnp.einsum('nchw,ck->nkhw', feat_nchw, w) + b[None, :, None, None]
    pooled = jnp.mean(feat_nchw, axis=(2, 3))                # GlobalPool 'AVG'
    pooled = pooled / jnp.sqrt(1.0 + BN_EPS)                 # eval BN (default params)
    lg = pooled @ w + b[None, :]
    return lg, lm


if __name__ == "__main__":
    # Small synthetic shapes: batch=2, backbone channels=32, heatmap 16x16, 5 classes.
    N, C, H, W, K = 2, 32, 16, 16, 5

    key = jax.random.PRNGKey(0)
    k_feat, k_w = jax.random.split(key)

    # "Backbone output" feature map (stand-in for DenseUNet(img)).
    feat_map = jax.random.normal(k_feat, (N, C, H, W), dtype=jnp.float32)

    # Classifier init per PyTorch: weight.normal_(0, 0.01), bias zero.
    # K 1x1 conv heads (C -> 1), stacked into W[C, K].
    w = 0.01 * jax.random.normal(k_w, (C, K), dtype=jnp.float32)
    b = jnp.zeros((K,), dtype=jnp.float32)

    logits, logit_maps = chex_classifier_forward(feat_map, w, b)
    logits = jax.block_until_ready(logits)
    logit_maps = jax.block_until_ready(logit_maps)

    lg_ref, lm_ref = ref_forward(feat_map, w, b)
    assert logits.shape == (N, K) and logit_maps.shape == (N, K, H, W)
    assert jnp.allclose(logits, lg_ref, rtol=1e-5, atol=1e-5)
    assert jnp.allclose(logit_maps, lm_ref, rtol=1e-5, atol=1e-5)

    print("KERNEL_OK")
</pallas_src>

<mosaic_0001>
module attributes {stable_mosaic.version = 11 : i64} {
  func.func @chex_head_kernel(%arg0: i32, %arg1: memref<1x32x256xf32, #tpu.memory_space<vmem>>, %arg2: memref<5x32xf32, #tpu.memory_space<vmem>>, %arg3: memref<5x1xf32, #tpu.memory_space<vmem>>, %arg4: memref<1x5x256xf32, #tpu.memory_space<vmem>>, %arg5: memref<1x5x1xf32, #tpu.memory_space<vmem>>) attributes {dimension_semantics = [#tpu.dimension_semantics<parallel>], iteration_bounds = array<i64: 2>, scalar_prefetch = 0 : i64, scratch_operands = 0 : i64, tpu.core_type = #tpu.core_type<tc>, window_params = [{transform_indices = @transform_0, window_bounds = array<i64: 1, 32, 256>}, {pipeline_mode = #tpu.pipeline_mode<synchronous>, transform_indices = @transform_1, window_bounds = array<i64: 5, 32>}, {pipeline_mode = #tpu.pipeline_mode<synchronous>, transform_indices = @transform_2, window_bounds = array<i64: 5, 1>}, {transform_indices = @transform_3, window_bounds = array<i64: 1, 5, 256>}, {transform_indices = @transform_4, window_bounds = array<i64: 1, 5, 1>}]} {
    %c0 = arith.constant 0 : index
    %c0_0 = arith.constant 0 : index
    %0 = vector.load %arg2[%c0, %c0_0] : memref<5x32xf32, #tpu.memory_space<vmem>>, vector<5x32xf32>
    %c0_1 = arith.constant 0 : index
    %c0_2 = arith.constant 0 : index
    %1 = vector.load %arg3[%c0_1, %c0_2] : memref<5x1xf32, #tpu.memory_space<vmem>>, vector<5x1xf32>
    %c0_3 = arith.constant 0 : index
    %c0_4 = arith.constant 0 : index
    %c0_5 = arith.constant 0 : index
    %2 = vector.load %arg1[%c0_3, %c0_4, %c0_5] : memref<1x32x256xf32, #tpu.memory_space<vmem>>, vector<1x32x256xf32>
    %3 = vector.shape_cast %2 : vector<1x32x256xf32> to vector<32x256xf32>
    %cst = arith.constant dense<0.000000e+00> : vector<5x256xf32>
    %4 = tpu.matmul %0, %3, %cst {dimension_numbers = #tpu.dot_dimension_numbers<[1], [0], [0], [1], [0, 0, 1, 1], [], []>} : vector<5x32xf32>, vector<32x256xf32>, vector<5x256xf32> -> vector<5x256xf32>
    %5 = vector.broadcast %1 : vector<5x1xf32> to vector<5x256xf32>
    %6 = arith.addf %4, %5 : vector<5x256xf32>
    %c0_6 = arith.constant 0 : index
    %c0_7 = arith.constant 0 : index
    %c0_8 = arith.constant 0 : index
    %7 = vector.load %arg4[%c0_6, %c0_7, %c0_8] : memref<1x5x256xf32, #tpu.memory_space<vmem>>, vector<1x5x256xf32>
    %8 = vector.shape_cast %7 : vector<1x5x256xf32> to vector<5x256xf32>
    %9 = vector.shape_cast %6 : vector<5x256xf32> to vector<1x5x256xf32>
    tpu.vector_store %arg4[%c0_6, %c0_7, %c0_8], %9 {strides = array<i32>} : memref<1x5x256xf32, #tpu.memory_space<vmem>>, vector<1x5x256xf32>,
    %cst_9 = arith.constant dense<0.000000e+00> : vector<5xf32>
    %10 = vector.multi_reduction <add>, %4, %cst_9 [1] : vector<5x256xf32> to vector<5xf32>
    %11 = vector.shape_cast %10 : vector<5xf32> to vector<5x1xf32>
    %cst_10 = arith.constant 2.560000e+02 : f32
    %12 = vector.broadcast %cst_10 : f32 to vector<5x1xf32>
    %13 = arith.divf %11, %12 : vector<5x1xf32>
    %cst_11 = arith.constant 0.999994993 : f32
    %14 = vector.broadcast %cst_11 : f32 to vector<5x1xf32>
    %15 = arith.mulf %14, %13 : vector<5x1xf32>
    %16 = arith.addf %15, %1 : vector<5x1xf32>
    %c0_12 = arith.constant 0 : index
    %c0_13 = arith.constant 0 : index
    %c0_14 = arith.constant 0 : index
    %17 = vector.load %arg5[%c0_12, %c0_13, %c0_14] : memref<1x5x1xf32, #tpu.memory_space<vmem>>, vector<1x5x1xf32>
    %18 = vector.shape_cast %17 : vector<1x5x1xf32> to vector<5x1xf32>
    %19 = vector.shape_cast %16 : vector<5x1xf32> to vector<1x5x1xf32>
    tpu.vector_store %arg5[%c0_12, %c0_13, %c0_14], %19 {strides = array<i32>} : memref<1x5x1xf32, #tpu.memory_space<vmem>>, vector<1x5x1xf32>,
    return
  }
  func.func @transform_0(%arg0: i32) -> (i32, i32, i32) {
    %c0_i32 = arith.constant 0 : i32
    %c0_i32_0 = arith.constant 0 : i32
    %c0_i32_1 = arith.constant 0 : i32
    return %arg0, %c0_i32, %c0_i32_0 : i32, i32, i32
  }
  func.func @transform_1(%arg0: i32) -> (i32, i32) {
    %c0_i32 = arith.constant 0 : i32
    %c0_i32_0 = arith.constant 0 : i32
    %c0_i32_1 = arith.constant 0 : i32
    return %c0_i32, %c0_i32_0 : i32, i32
  }
  func.func @transform_2(%arg0: i32) -> (i32, i32) {
    %c0_i32 = arith.constant 0 : i32
    %c0_i32_0 = arith.constant 0 : i32
    %c0_i32_1 = arith.constant 0 : i32
    return %c0_i32, %c0_i32_0 : i32, i32
  }
  func.func @transform_3(%arg0: i32) -> (i32, i32, i32) {
    %c0_i32 = arith.constant 0 : i32
    %c0_i32_0 = arith.constant 0 : i32
    %c0_i32_1 = arith.constant 0 : i32
    return %arg0, %c0_i32, %c0_i32_0 : i32, i32, i32
  }
  func.func @transform_4(%arg0: i32) -> (i32, i32, i32) {
    %c0_i32 = arith.constant 0 : i32
    %c0_i32_0 = arith.constant 0 : i32
    %c0_i32_1 = arith.constant 0 : i32
    return %arg0, %c0_i32, %c0_i32_0 : i32, i32, i32
  }
}

</mosaic_0001>

<llo_original>
// kernel: tpu_custom_call.1
$region0: #{tpu_custom_call.1}
  #allocation0 [shape = 'u32[]', space=smem, size = 0x4, offset = 0x4, fixed_abs, tag = 'smem constant byte address 0x4 - core index']
  #allocation1 [shape = 'u32[72,128]{1,0:T(1,128)}', space=vmem, size = 0x9000, scoped, tag = 'internal scratch']
  %s0 = inlined_call_operand.hbm [shape: f32[2,32,256], index: 0, kind: input, shape index: {}]
  %s1 = inlined_call_operand.vmem [shape: f32[5,32], index: 1, kind: input, shape index: {}]
  %s2 = inlined_call_operand.vmem [shape: f32[5,1], index: 2, kind: input, shape index: {}]
  %s3 = inlined_call_operand.vmem [shape: f32[2,5,256], index: 3, kind: output, shape index: {0}]
  %s4 = inlined_call_operand.vmem [shape: f32[2,5,1], index: 4, kind: output, shape index: {1}]
  %5 = xla_tuple %s3, %s4
  %s6 = sld [smem:[#allocation0]]
  $region57: #{tpu_custom_call.1} parent=0
    _
  %s8 = ssub.s32 1, %s6
  %s9 = scalar_select 0, %s8, %s6
  $region1: #{tpu_custom_call.1} parent=0
    #allocation2 [shape = 'u8[65536]{0}', space=vmem, size = 0x10000, scoped, tag = 'input window, operand 0']
    #allocation3 [shape = 's32[2]{0}', space=sflag, size = 0x8, scoped, tag = 'scoped memory for tpu_custom_call.1']
    %10 = vsyncpa [#allocation3], 0
    %s11 = scalar_lea.sflag [#allocation3], 1
    %12 = vsyncpa %s11, 0
    loop: start=0, step=1, limit=4
    $region2: #{tpu_custom_call.1} parent=1 // loop_pre_header
      _
    $region3: #{tpu_custom_call.1} parent=1 // loop_header
      %s14 = sphi 0, %s18
      %p15 = scmp.ge.s32.totalorder %s14, 4
      %s24 = sphi 0, %s26
      %s27 = sphi 0, %s24
      %s28 = sphi 0, %s27
      %s44 = sphi 0, %s28
      %s48 = sphi 0, %s48
      %s50 = sphi 0, %s48
      %s51 = sphi 0, %s50
      %s65 = sphi 0, %s51
      %s69 = sphi 0, %s69
      %s71 = sphi 0, %s69
      %s72 = sphi 0, %s71
      %s86 = sphi 0, %s72
      %s92 = sphi 0, %s94
      %s95 = sphi 0, %s92
      %s96 = sphi 0, %s95
      %s112 = sphi 0, %s96
      %s118 = sphi 0, %s120
      %s121 = sphi 0, %s118
      %s122 = sphi 0, %s121
      %s138 = sphi 0, %s122
    $region4: #{tpu_custom_call.1} parent=1 // loop_header_branch
      %17 = sbr.rel (%p15) target = $region8
    $region5: #{tpu_custom_call.1} parent=1 // loop_body
      %s19 = ssub.s32 %s14, 1
      %s20 = ssub.s32 %s14, 2
      %s21 = sadd.s32 %s14, 1
      %s22 = ssub.s32 %s14, %s21
      %p23 = scmp.eq.s32.totalorder %s22, 0
      %s25 = sadd.s32 %s24, 1
      %s26 = scalar_select %p23, %s24, %s25
      %p29 = pneg %p23
      %p30 = scmp.eq.s32.totalorder %s14, 1
      %p31 = por %p29, %p30
      %p32 = scmp.ne.s32.totalorder %s24, %s27
      %p33 = scmp.eq.s32.totalorder %s14, 0
      %p34 = por %p32, %p33
      %p35 = scmp.ne.s32.totalorder %s24, %s27
      %p36 = scmp.eq.s32.totalorder %s19, 1
      %p37 = por %p35, %p36
      %p38 = scmp.ne.s32.totalorder %s27, %s28
      %p39 = scmp.eq.s32.totalorder %s19, 0
      %p40 = por %p38, %p39
      %p41 = scmp.ne.s32.totalorder %s27, %s28
      %p42 = scmp.eq.s32.totalorder %s20, 1
      %p43 = por %p41, %p42
      %p45 = scmp.ne.s32.totalorder %s28, %s44
      %p46 = scmp.eq.s32.totalorder %s20, 0
      %p47 = por %p45, %p46
      %s49 = sadd.s32 %s48, 1
      %p52 = scmp.eq.s32.totalorder %s14, 1
      %p53 = scmp.ne.s32.totalorder %s48, %s50
      %p54 = scmp.eq.s32.totalorder %s14, 0
      %p55 = por %p53, %p54
      %p56 = scmp.ne.s32.totalorder %s48, %s50
      %p57 = scmp.eq.s32.totalorder %s19, 1
      %p58 = por %p56, %p57
      %p59 = scmp.ne.s32.totalorder %s50, %s51
      %p60 = scmp.eq.s32.totalorder %s19, 0
      %p61 = por %p59, %p60
      %p62 = scmp.ne.s32.totalorder %s50, %s51
      %p63 = scmp.eq.s32.totalorder %s20, 1
      %p64 = por %p62, %p63
      %p66 = scmp.ne.s32.totalorder %s51, %s65
      %p67 = scmp.eq.s32.totalorder %s20, 0
      %p68 = por %p66, %p67
      %s70 = sadd.s32 %s69, 1
      %p73 = scmp.eq.s32.totalorder %s14, 1
      %p74 = scmp.ne.s32.totalorder %s69, %s71
      %p75 = scmp.eq.s32.totalorder %s14, 0
      %p76 = por %p74, %p75
      %p77 = scmp.ne.s32.totalorder %s69, %s71
      %p78 = scmp.eq.s32.totalorder %s19, 1
      %p79 = por %p77, %p78
      %p80 = scmp.ne.s32.totalorder %s71, %s72
      %p81 = scmp.eq.s32.totalorder %s19, 0
      %p82 = por %p80, %p81
      %p83 = scmp.ne.s32.totalorder %s71, %s72
      %p84 = scmp.eq.s32.totalorder %s20, 1
      %p85 = por %p83, %p84
      %p87 = scmp.ne.s32.totalorder %s72, %s86
      %p88 = scmp.eq.s32.totalorder %s20, 0
      %p89 = por %p87, %p88
      %s90 = ssub.s32 %s14, %s21
      %p91 = scmp.eq.s32.totalorder %s90, 0
      %s93 = sadd.s32 %s92, 1
      %s94 = scalar_select %p91, %s92, %s93
      %p97 = pneg %p91
      %p98 = scmp.eq.s32.totalorder %s14, 1
      %p99 = por %p97, %p98
      %p100 = scmp.ne.s32.totalorder %s92, %s95
      %p101 = scmp.eq.s32.totalorder %s14, 0
      %p102 = por %p100, %p101
      %p103 = scmp.ne.s32.totalorder %s92, %s95
      %p104 = scmp.eq.s32.totalorder %s19, 1
      %p105 = por %p103, %p104
      %p106 = scmp.ne.s32.totalorder %s95, %s96
      %p107 = scmp.eq.s32.totalorder %s19, 0
      %p108 = por %p106, %p107
      %p109 = scmp.ne.s32.totalorder %s95, %s96
      %p110 = scmp.eq.s32.totalorder %s20, 1
      %p111 = por %p109, %p110
      %p113 = scmp.ne.s32.totalorder %s96, %s112
      %p114 = scmp.eq.s32.totalorder %s20, 0
      %p115 = por %p113, %p114
      %s116 = ssub.s32 %s14, %s21
      %p117 = scmp.eq.s32.totalorder %s116, 0
      %s119 = sadd.s32 %s118, 1
      %s120 = scalar_select %p117, %s118, %s119
      %p123 = pneg %p117
      %p124 = scmp.eq.s32.totalorder %s14, 1
      %p125 = por %p123, %p124
      %p126 = scmp.ne.s32.totalorder %s118, %s121
      %p127 = scmp.eq.s32.totalorder %s14, 0
      %p128 = por %p126, %p127
      %p129 = scmp.ne.s32.totalorder %s118, %s121
      %p130 = scmp.eq.s32.totalorder %s19, 1
      %p131 = por %p129, %p130
      %p132 = scmp.ne.s32.totalorder %s121, %s122
      %p133 = scmp.eq.s32.totalorder %s19, 0
      %p134 = por %p132, %p133
      %p135 = scmp.ne.s32.totalorder %s121, %s122
      %p136 = scmp.eq.s32.totalorder %s20, 1
      %p137 = por %p135, %p136
      %p139 = scmp.ne.s32.totalorder %s122, %s138
      %p140 = scmp.eq.s32.totalorder %s20, 0
      %p141 = por %p139, %p140
      %p142 = scmp.le.s32.totalorder 1, %s14
      %p143 = scmp.lt.s32.totalorder %s14, 3
      %p144 = pnand %p142, %p143
      %p145 = pneg %p144
      // Predicated region
      $region9: #{tpu_custom_call.1} parent=5 // pred_check
        _
      $region10: #{tpu_custom_call.1} parent=5 // pred_check_branch
        %147 = sbr.rel (%p144) target = $region12
      $region11: #{tpu_custom_call.1} parent=5 // pred_region
        %s148 = ssub.s32 %s14, 1
        // Predicated region
        $region13: #{tpu_custom_call.1} parent=11 // pred_check
          %p149 = pneg %p61
        $region14: #{tpu_custom_call.1} parent=11 // pred_check_branch
          %151 = sbr.rel (%p149) target = $region16
        $region15: #{tpu_custom_call.1} parent=11 // pred_region
          _
        $region16: #{tpu_custom_call.1} parent=11 // pred_fallthru
          _
        // Predicated region
        $region17: #{tpu_custom_call.1} parent=11 // pred_check
          %p152 = pneg %p82
        $region18: #{tpu_custom_call.1} parent=11 // pred_check_branch
          %154 = sbr.rel (%p152) target = $region20
        $region19: #{tpu_custom_call.1} parent=11 // pred_region
          _
        $region20: #{tpu_custom_call.1} parent=11 // pred_fallthru
          _
      $region12: #{tpu_custom_call.1} parent=5 // pred_fallthru
        _
      %p155 = scmp.lt.s32.totalorder %s14, 2
      // Predicated region
      $region21: #{tpu_custom_call.1} parent=5 // pred_check
        %p156 = pneg %p155
      $region22: #{tpu_custom_call.1} parent=5 // pred_check_branch
        %158 = sbr.rel (%p156) target = $region24
      $region23: #{tpu_custom_call.1} parent=5 // pred_region
        // Predicated region
        $region25: #{tpu_custom_call.1} parent=23 // pred_check
          %p159 = pneg %p34
        $region26: #{tpu_custom_call.1} parent=23 // pred_check_branch
          %161 = sbr.rel (%p159) target = $region28
        $region27: #{tpu_custom_call.1} parent=23 // pred_region
          %s162 = sand.u32 %s24, 1
          %s163 = scalar_lea.sflag [#allocation3], %s162
          %s164 = sand.u32 %s24, 1
          %s165 = smul.addr %s164, 64
          %s166 = scalar_lea.vmem [#allocation2], %s165
          %168 = vsyncadd %s163, 0
          %s169 = smul.addr %s14, 8
          %s170 = smul.addr %s169, 8
          %s171 = scalar_lea.hbm %s0, %s170
          %s172 = sshll.u32 %s171, 4
          %s173 = int_to_ptr.hbm [resolvable:$true] %s172
          %s174 = sshll.u32 %s166, 4
          %s175 = int_to_ptr.vmem [resolvable:$true] %s174
          %180 = dma.hbm_to_vmem [thread:$0]  %s173, 1024, %s175, %s163, 256, 256, 16
        $region28: #{tpu_custom_call.1} parent=23 // pred_fallthru
          _
      $region24: #{tpu_custom_call.1} parent=5 // pred_fallthru
        _
      %p181 = scmp.le.s32.totalorder 1, %s14
      %p182 = scmp.lt.s32.totalorder %s14, 3
      %p183 = pnand %p181, %p182
      %p184 = pneg %p183
      // Predicated region
      $region29: #{tpu_custom_call.1} parent=5 // pred_check
        _
      $region30: #{tpu_custom_call.1} parent=5 // pred_check_branch
        %186 = sbr.rel (%p183) target = $region32
      $region31: #{tpu_custom_call.1} parent=5 // pred_region
        %s187 = ssub.s32 %s14, 1
        %s188 = sand.u32 %s27, 1
        %s189 = scalar_lea.sflag [#allocation3], %s188
        %s190 = sand.u32 %s27, 1
        %s191 = smul.addr %s190, 64
        %s192 = scalar_lea.vmem [#allocation2], %s191
        // Predicated region
        $region33: #{tpu_custom_call.1} parent=31 // pred_check
          %p193 = pneg %p40
        $region34: #{tpu_custom_call.1} parent=31 // pred_check_branch
          %195 = sbr.rel (%p193) target = $region36
        $region35: #{tpu_custom_call.1} parent=31 // pred_region
          %197 = dma.done %s189, 1024
        $region36: #{tpu_custom_call.1} parent=31 // pred_fallthru
          _
        %s198 = sand.u32 %s27, 1
        %s199 = scalar_lea.sflag [#allocation3], %s198
        %s200 = sand.u32 %s27, 1
        %s201 = smul.addr %s200, 64
        %s202 = scalar_lea.vmem [#allocation2], %s201
        %p203 = pneg %p40
        %p204 = pneg %p37
        %p205 = pneg %p61
        %p206 = pneg %p58
        %p207 = pneg %p82
        %p208 = pneg %p79
        %p209 = pneg %p108
        %p210 = pneg %p105
        %p211 = scmp.lt.s32.totalorder %s19, 1
        %s212 = scalar_select %p211, %s19, 1
        %s213 = smul.addr %s212, 2
        %s214 = smul.addr %s213, 8
        %s215 = scalar_lea.vmem %s3, %s214
        %p216 = pneg %p134
        %p217 = pneg %p131
        %p218 = scmp.lt.s32.totalorder %s19, 1
        %s219 = scalar_select %p218, %s19, 1
        %s220 = smul.addr %s219, 8
        %s221 = scalar_lea.vmem %s4, %s220
        %p222 = scmp.lt.s32.totalorder %s19, 1
        %s223 = scalar_select %p222, %s19, 1
        %s224 = smul.addr %s223, 2
        %s225 = smul.addr %s224, 8
        %s226 = scalar_lea.vmem %s3, %s225
        %p227 = scmp.lt.s32.totalorder %s19, 1
        %s228 = scalar_select %p227, %s19, 1
        %s229 = smul.addr %s228, 8
        %s230 = scalar_lea.vmem %s4, %s229
        %v231 = vld [vmem:[%s1] sm:$0x1f]
        %v232 = vld [vmem:[%s2] sm:$0x1f]
        %v233 = vld [vmem:[%s192] sm:$0xff]
        %v234 = vld [vmem:[%s192 + $0x8] sm:$0xff]
        %v235 = vld [vmem:[%s192 + $0x10] sm:$0xff]
        %v236 = vld [vmem:[%s192 + $0x18] sm:$0xff]
        %v237 = vld [vmem:[%s192 + $0x20] sm:$0xff]
        %v238 = vld [vmem:[%s192 + $0x28] sm:$0xff]
        %v239 = vld [vmem:[%s192 + $0x30] sm:$0xff]
        %v240 = vld [vmem:[%s192 + $0x38] sm:$0xff]
        %vm241 = vcmask 261120
        %v243 = vsel %vm241, %v231, 0
        %245 = vmatpush.msra.mxu0 0.0
        %246 = vmatpush.msra.mxu0 0.0
        %247 = vmatpush.msra.mxu0 0.0
        %248 = vmatpush.msra.mxu0 0.0
        %249 = vmatpush.msra.mxu0 0.0
        %250 = vmatpush.msra.mxu0 0.0
        %251 = vmatpush.msra.mxu0 0.0
        %252 = vmatpush.msra.mxu0 0.0
        %253 = vmatpush.msra.mxu0 0.0
        %254 = vmatpush.msra.mxu0 0.0
        %255 = vmatpush.msra.mxu0 0.0
        %256 = vmatpush.msra.mxu0 0.0
        %257 = vmatpush.msra.mxu0 %v239
        %258 = vmatpush.msra.mxu0 %v237
        %259 = vmatpush.msra.mxu0 %v235
        %260 = vmatpush.msra.mxu0 %v233
        %261 = vmatmul.f32.gmra.mxu0 %v243
        %v262 = vpop.f32.mrf.mxu0
        %v263 = vadd.f32 0.0, %v262
        %264 = vdwg.mxu0
        %265 = vmatpush.msra.mxu0 0.0
        %266 = vmatpush.msra.mxu0 0.0
        %267 = vmatpush.msra.mxu0 0.0
        %268 = vmatpush.msra.mxu0 0.0
        %269 = vmatpush.msra.mxu0 0.0
        %270 = vmatpush.msra.mxu0 0.0
        %271 = vmatpush.msra.mxu0 0.0
        %272 = vmatpush.msra.mxu0 0.0
        %273 = vmatpush.msra.mxu0 0.0
        %274 = vmatpush.msra.mxu0 0.0
        %275 = vmatpush.msra.mxu0 0.0
        %276 = vmatpush.msra.mxu0 0.0
        %277 = vmatpush.msra.mxu0 %v240
        %278 = vmatpush.msra.mxu0 %v238
        %279 = vmatpush.msra.mxu0 %v236
        %280 = vmatpush.msra.mxu0 %v234
        %281 = vmatmul.f32.gmra.mxu0 %v243
        %v282 = vpop.f32.mrf.mxu0
        %v283 = vadd.f32 0.0, %v282
        %284 = vdwg.mxu0
        %286 = vset.pattern.permute.xlu0 0
        %287 = vperm.xlu0 %286, %v232
        %v288 = vpop.permute.xlu0 %287
        %v290 = vadd.f32 %v263, %v288
        %v291 = vadd.f32 %v283, %v288
        %292 = vst [vmem:[%s226] sm:$0x1f] %v290
        %293 = vst [vmem:[%s226 + $0x8] sm:$0x1f] %v291
        %vm294 = vcmask 1044480
        %v295 = vsel %vm294, %v263, 0.0
        %v296 = vsel %vm294, %v283, 0.0
        %v297 = vadd.f32 %v295, %v296
        %298 = vadd.xlane.f32.xlu0 %v297
        %v299 = vpop.xlane.xlu0 %298
        %v300 = vrcp.pop 256.0
        %v301 = vmul.f32 256.0, %v300
        %v302 = vsub.f32 1.0, %v301
        %v303 = vmul.f32 %v300, %v302
        %v304 = vadd.f32 %v300, %v303
        %vm305 = vweird.f32 %v300
        %v306 = vsel %vm305, %v300, %v304
        %v307 = vmul.f32 %v299, %v306
        %v308 = vmul.f32 %v307, 0.999995
        %v309 = vadd.f32 %v308, %v232
        %vm310 = vcmask 4096
        %311 = vst.msk [vmem:[%s230] sm:$0x1f] %vm310, %v309
        %p312 = scmp.lt.s32.totalorder %s19, 1
        %s313 = scalar_select %p312, %s19, 1
        %s314 = smul.addr %s313, 2
        %s315 = smul.addr %s314, 8
        %s316 = scalar_lea.vmem %s3, %s315
        %p317 = scmp.lt.s32.totalorder %s19, 1
        %s318 = scalar_select %p317, %s19, 1
        %s319 = smul.addr %s318, 8
        %s320 = scalar_lea.vmem %s4, %s319
        // Predicated region
        $region37: #{tpu_custom_call.1} parent=31 // pred_check
          %p321 = pneg %p105
        $region38: #{tpu_custom_call.1} parent=31 // pred_check_branch
          %323 = sbr.rel (%p321) target = $region40
        $region39: #{tpu_custom_call.1} parent=31 // pred_region
          _
        $region40: #{tpu_custom_call.1} parent=31 // pred_fallthru
          _
        // Predicated region
        $region41: #{tpu_custom_call.1} parent=31 // pred_check
          %p324 = pneg %p131
        $region42: #{tpu_custom_call.1} parent=31 // pred_check_branch
          %326 = sbr.rel (%p324) target = $region44
        $region43: #{tpu_custom_call.1} parent=31 // pred_region
          _
        $region44: #{tpu_custom_call.1} parent=31 // pred_fallthru
          _
      $region32: #{tpu_custom_call.1} parent=5 // pred_fallthru
        _
      %p327 = scmp.le.s32.totalorder 2, %s14
      // Predicated region
      $region45: #{tpu_custom_call.1} parent=5 // pred_check
        %p328 = pneg %p327
      $region46: #{tpu_custom_call.1} parent=5 // pred_check_branch
        %330 = sbr.rel (%p328) target = $region48
      $region47: #{tpu_custom_call.1} parent=5 // pred_region
        %s331 = ssub.s32 %s14, 2
        // Predicated region
        $region49: #{tpu_custom_call.1} parent=47 // pred_check
          %p332 = pneg %p111
        $region50: #{tpu_custom_call.1} parent=47 // pred_check_branch
          %334 = sbr.rel (%p332) target = $region52
        $region51: #{tpu_custom_call.1} parent=47 // pred_region
          %p335 = scmp.lt.s32.totalorder %s20, 1
          %s336 = scalar_select %p335, %s20, 1
          %s337 = smul.addr %s336, 2
          %s338 = smul.addr %s337, 8
          %s339 = scalar_lea.vmem %s3, %s338
        $region52: #{tpu_custom_call.1} parent=47 // pred_fallthru
          _
        // Predicated region
        $region53: #{tpu_custom_call.1} parent=47 // pred_check
          %p340 = pneg %p137
        $region54: #{tpu_custom_call.1} parent=47 // pred_check_branch
          %342 = sbr.rel (%p340) target = $region56
        $region55: #{tpu_custom_call.1} parent=47 // pred_region
          %p343 = scmp.lt.s32.totalorder %s20, 1
          %s344 = scalar_select %p343, %s20, 1
          %s345 = smul.addr %s344, 8
          %s346 = scalar_lea.vmem %s4, %s345
        $region56: #{tpu_custom_call.1} parent=47 // pred_fallthru
          _
      $region48: #{tpu_custom_call.1} parent=5 // pred_fallthru
        _
    $region6: #{tpu_custom_call.1} parent=1 // loop_footer
      %s18 = sadd.s32 1, %s14
    $region7: #{tpu_custom_call.1} parent=1 // loop_footer_branch
      %13 = sbr.rel target = $region3
    $region8: #{tpu_custom_call.1} parent=1 // loop_exit
      _
    %347 = vsyncpa [#allocation3], 1
    %s348 = scalar_lea.sflag [#allocation3], 1
    %349 = vsyncpa %s348, 1

</llo_original>
